<compile_context>
chip_gen: v6e
topology: v6e:2x2x1
jax: 0.10.0
libtpu: 0.0.40
codegen_flags: <defaults>
</compile_context>

<pallas_src>
import functools

import jax
import jax.numpy as jnp
from jax.experimental import pallas as pl
from jax.experimental.pallas import tpu as pltpu


# ---------------------------------------------------------------------------
# One-time probe: does pltpu.roll follow jnp.roll's sign convention
# (out[i] == x[(i - shift) % n])?  Cached; costs one tiny kernel launch.
# ---------------------------------------------------------------------------
_ROLL_LIKE_JNP = None


def _roll_like_jnp():
    global _ROLL_LIKE_JNP
    if _ROLL_LIKE_JNP is None:
        x = jnp.arange(8 * 128, dtype=jnp.float32).reshape(8, 128)

        def probe(x_ref, o_ref):
            o_ref[...] = pltpu.roll(x_ref[...], shift=1, axis=1)

        out = pl.pallas_call(
            probe, out_shape=jax.ShapeDtypeStruct((8, 128), jnp.float32))(x)
        if bool(jnp.array_equal(out, jnp.roll(x, 1, axis=1))):
            _ROLL_LIKE_JNP = True
        elif bool(jnp.array_equal(out, jnp.roll(x, -1, axis=1))):
            _ROLL_LIKE_JNP = False
        else:
            raise RuntimeError("pltpu.roll probe returned an unexpected pattern")
    return _ROLL_LIKE_JNP


# ---------------------------------------------------------------------------
# Kernel: one image x one Cout tile per grid step.
# ---------------------------------------------------------------------------
def _conv_tap_kernel(x_ref, w_ref, b_ref, hc_ref, wc_ref, o_ref, *,
                     ksize, pad, H, W, roll_like_jnp):
    # x_ref : (Cin, H*W)          one image, spatially flattened
    # w_ref : (k*k, CoutT, Cin)   per-tap weight matrices (t = dy*k + dx), bf16
    # b_ref : (CoutT, 1)          bias, f32
    # hc/wc : (1, H*W) int32      row / column coordinate of every output pixel
    # o_ref : (CoutT, H*W)
    HW = H * W
    xv = x_ref[...].astype(jnp.float32)          # shift / mask in f32 for safety
    hc = hc_ref[...]
    wc = wc_ref[...]
    acc = jnp.zeros(o_ref.shape, jnp.float32)

    for t in range(ksize * ksize):
        dy, dx = t // ksize, t % ksize
        # Output pixel m = h*W + w reads source pixel (h+dy-pad, w+dx-pad),
        # i.e. flat index m + s.  Realise the shift as a circular lane roll,
        # then zero out-of-image columns with the coordinate mask.
        s = (dy - pad) * W + (dx - pad)
        shift = ((-s) if roll_like_jnp else s) % HW
        xs = pltpu.roll(xv, shift=shift, axis=1) if shift else xv
        hsrc = hc + (dy - pad)
        wsrc = wc + (dx - pad)
        valid = (hsrc >= 0) & (hsrc < H) & (wsrc >= 0) & (wsrc < W)   # (1, HW)
        rhs = jnp.where(valid, xs, 0.0).astype(jnp.bfloat16)          # (Cin, HW)
        acc = acc + jax.lax.dot_general(
            w_ref[t], rhs,                                            # (CoutT,Cin)x(Cin,HW)
            dimension_numbers=(((1,), (0,)), ((), ())),
            preferred_element_type=jnp.float32)

    o_ref[...] = (acc + b_ref[...]).astype(o_ref.dtype)


# ---------------------------------------------------------------------------
# Wrapper.
# ---------------------------------------------------------------------------
def myconv2d_forward(x, weight, bias, *, kernel_size, upscale=False,
                     downscale=False, cout_block=256, vmem_limit_bytes=None):
    """MyConv2d.forward (default path).  x: (N, Cin, H, W).  `weight` is already
    scaled by w_mul and `bias` by b_mul (see make_myconv2d_params)."""
    assert kernel_size % 2 == 1, "'same'-padding conv path assumes odd kernel_size"
    if upscale:
        # Small-spatial branch of MyConv2d: Upscale2d (nearest-neighbour x2), then conv.
        # TODO(synk): fold the x2 upscale into the kernel's tap gather instead of
        # materializing the 4x larger activation, and implement the fused
        # conv_transpose2d branch taken when min(H, W) * 2 >= 128.
        x = jnp.repeat(jnp.repeat(x, 2, axis=2), 2, axis=3)
    # TODO(synk): downscale / intermediate (BlurLayer / Downscale2d) branches not implemented.
    del downscale

    N, Cin, H, W = x.shape
    Cout = weight.shape[0]
    pad = kernel_size // 2
    HW = H * W
    k2 = kernel_size * kernel_size

    # Per-tap weight matrices wt[dy*k+dx, co, ci] = weight[co, ci, dy, dx], bf16 for the MXU.
    wt = jnp.transpose(weight, (2, 3, 0, 1)).reshape(k2, Cout, Cin).astype(jnp.bfloat16)
    if bias is None:
        bias = jnp.zeros((Cout,), jnp.float32)
    b2 = bias.reshape(Cout, 1).astype(jnp.float32)

    # Free (contiguous) reshape: the kernel reads x from HBM exactly once.
    # TODO(synk): spatial (row) tiling with a halo for images where Cin*H*W no
    # longer fits VMEM (largest StyleGAN resolutions).
    x2 = x.reshape(N, Cin, HW)

    # Pixel coordinates of every output column (tiny VMEM-resident constants; avoids
    # in-kernel integer div/mod).
    m = jnp.arange(HW, dtype=jnp.int32)
    hcoord = (m // W).reshape(1, HW)
    wcoord = (m % W).reshape(1, HW)

    # Cout tiling so production channel counts don't blow up the VMEM-resident
    # weight slice / accumulator (toy Cout=8 -> a single tile).
    ct = Cout if Cout <= cout_block else cout_block
    assert Cout % ct == 0, "Cout must be divisible by cout_block"

    kern = functools.partial(
        _conv_tap_kernel, ksize=kernel_size, pad=pad, H=H, W=W,
        roll_like_jnp=_roll_like_jnp())

    cp_kwargs = dict(dimension_semantics=("parallel", "parallel"))
    if vmem_limit_bytes is not None:
        cp_kwargs["vmem_limit_bytes"] = vmem_limit_bytes

    out = pl.pallas_call(
        kern,
        out_shape=jax.ShapeDtypeStruct((N, Cout, HW), x.dtype),
        grid_spec=pltpu.PrefetchScalarGridSpec(
            num_scalar_prefetch=0,
            grid=(N, Cout // ct),
            in_specs=[
                # Activations: one image per step, re-used across the Cout axis.
                pl.BlockSpec((None, Cin, HW), lambda n, c: (n, 0, 0)),
                # Constant-index operands stay VMEM-resident (fetched once).
                # (At production sizes add pipeline_mode=pl.Buffered(1) here to
                #  drop their second pipeline buffer.)
                pl.BlockSpec((k2, ct, Cin), lambda n, c: (0, c, 0)),   # weights
                pl.BlockSpec((ct, 1), lambda n, c: (c, 0)),            # bias
                pl.BlockSpec((1, HW), lambda n, c: (0, 0)),            # row coords
                pl.BlockSpec((1, HW), lambda n, c: (0, 0)),            # col coords
            ],
            out_specs=pl.BlockSpec((None, ct, HW), lambda n, c: (n, c, 0)),
        ),
        compiler_params=pltpu.CompilerParams(**cp_kwargs),
    )(x2, wt, b2, hcoord, wcoord)

    # Free reshape back to NCHW -- no transpose; the kernel already wrote
    # NCHW-contiguous (N, Cout, H*W) tiles.
    return out.reshape(N, Cout, H, W)


def make_myconv2d_params(key, input_channels, output_channels, kernel_size, *,
                         gain=2 ** 0.5, use_wscale=True, lrmul=1.0, use_bias=True):
    """Mirror MyConv2d.__init__, with w_mul / b_mul folded into the returned params."""
    he_std = gain * (input_channels * kernel_size ** 2) ** (-0.5)
    if use_wscale:
        init_std = 1.0 / lrmul
        w_mul = he_std * lrmul
    else:
        init_std = he_std / lrmul
        w_mul = lrmul
    weight = jax.random.normal(
        key, (output_channels, input_channels, kernel_size, kernel_size),
        dtype=jnp.float32) * init_std
    bias = jnp.zeros((output_channels,), jnp.float32) if use_bias else None
    b_mul = lrmul
    # Fold the runtime scales once at construction time.
    weight = weight * jnp.float32(w_mul)
    if bias is not None:
        bias = bias * jnp.float32(b_mul)
    return weight, bias


def _ref_conv2d(x, weight, bias, kernel_size):
    """Pure-JAX reference for F.conv2d(x, weight, bias, padding=kernel_size // 2)."""
    pad = kernel_size // 2
    y = jax.lax.conv_general_dilated(
        x, weight, window_strides=(1, 1),
        padding=((pad, pad), (pad, pad)),
        dimension_numbers=("NCHW", "OIHW", "NCHW"),
        precision=jax.lax.Precision.HIGHEST)
    if bias is not None:
        y = y + bias.reshape(1, -1, 1, 1)
    return y


if __name__ == "__main__":
    key = jax.random.PRNGKey(0)
    k_w, k_b, k_x, k_w2 = jax.random.split(key, 4)

    # Shapes consistent with a small StyleGAN MyConv2d block.
    N, Cin, Cout, H, W, ksize = 2, 4, 8, 16, 16, 3

    weight, bias = make_myconv2d_params(k_w, Cin, Cout, ksize, use_wscale=True)
    # PyTorch initializes bias to zeros; perturb it here so the bias path is exercised.
    bias = bias + 0.1 * jax.random.normal(k_b, (Cout,), dtype=jnp.float32)
    x = jax.random.normal(k_x, (N, Cin, H, W), dtype=jnp.float32)

    # The kernel feeds the MXU bf16 operands (f32 accumulate), so compare against a
    # reference computed from the same bf16-rounded operands.
    bf16 = lambda a: a.astype(jnp.bfloat16).astype(jnp.float32)

    # Plain 'same' conv path (default MyConv2d: no upscale/downscale/intermediate).
    out = myconv2d_forward(x, weight, bias, kernel_size=ksize)
    out = jax.block_until_ready(out)
    ref = _ref_conv2d(bf16(x), bf16(weight), bias, ksize)
    assert out.shape == (N, Cout, H, W), out.shape
    err = float(jnp.max(jnp.abs(out - ref)))
    assert jnp.allclose(out, ref, atol=1e-3, rtol=1e-3), err

    # Upscale path (small spatial -> Upscale2d nearest-neighbour x2, then conv).
    weight_u, bias_u = make_myconv2d_params(k_w2, Cin, Cout, ksize, use_wscale=True)
    out_u = myconv2d_forward(x, weight_u, bias_u, kernel_size=ksize, upscale=True)
    out_u = jax.block_until_ready(out_u)
    x_up = jnp.repeat(jnp.repeat(x, 2, axis=2), 2, axis=3)
    ref_u = _ref_conv2d(bf16(x_up), bf16(weight_u), bias_u, ksize)
    assert out_u.shape == (N, Cout, 2 * H, 2 * W), out_u.shape
    assert jnp.allclose(out_u, ref_u, atol=1e-3, rtol=1e-3)

    print("KERNEL_OK")
</pallas_src>

<mosaic_0001>
module attributes {stable_mosaic.version = 11 : i64} {
  func.func @probe(%arg0: memref<8x128xf32, #tpu.memory_space<vmem>>, %arg1: memref<8x128xf32, #tpu.memory_space<vmem>>) attributes {dimension_semantics = [], scalar_prefetch = 0 : i64, scratch_operands = 0 : i64, tpu.core_type = #tpu.core_type<tc>} {
    %c0 = arith.constant 0 : index
    %c0_0 = arith.constant 0 : index
    %0 = vector.load %arg0[%c0, %c0_0] : memref<8x128xf32, #tpu.memory_space<vmem>>, vector<8x128xf32>
    %c1_i32 = arith.constant 1 : i32
    %1 = tpu.dynamic_rotate %0 by %c1_i32 dim 1 : vector<8x128xf32>, i32 -> vector<8x128xf32>
    %c0_1 = arith.constant 0 : index
    %c0_2 = arith.constant 0 : index
    %2 = vector.load %arg1[%c0_1, %c0_2] : memref<8x128xf32, #tpu.memory_space<vmem>>, vector<8x128xf32>
    tpu.vector_store %arg1[%c0_1, %c0_2], %1 {strides = array<i32>} : memref<8x128xf32, #tpu.memory_space<vmem>>, vector<8x128xf32>,
    return
  }
}

</mosaic_0001>

<llo_original>
// kernel: tpu_custom_call.1
$region0: #{tpu_custom_call.1}
  #allocation0 [shape = 'u32[]', space=smem, size = 0x4, offset = 0x4, fixed_abs, tag = 'smem constant byte address 0x4 - core index']
  #allocation1 [shape = 'u32[144,128]{1,0:T(1,128)}', space=vmem, size = 0x12000, scoped, tag = 'internal scratch']
  %s0 = inlined_call_operand.hbm [shape: f32[8,128], index: 0, kind: input, shape index: {}]
  %s1 = inlined_call_operand.hbm [shape: f32[8,128], index: 1, kind: output, shape index: {}]
  %s2 = sld [smem:[#allocation0]]
  $region18: #{tpu_custom_call.1} parent=0
    _
  %s4 = ssub.s32 1, %s2
  %s5 = scalar_select 0, %s4, %s2
  $region1: #{tpu_custom_call.1} parent=0
    #allocation2 [shape = 'u8[4096]{0}', space=vmem, size = 0x1000, scoped, tag = 'input window, operand 0, single buffered']
    #allocation3 [shape = 's32[1]{0}', space=sflag, size = 0x4, scoped, tag = 'scoped memory for tpu_custom_call.1']
    #allocation4 [shape = 's32[1]{0}', space=sflag, size = 0x4, scoped, tag = 'scoped memory for tpu_custom_call.1']
    #allocation5 [shape = 'u8[4096]{0}', space=vmem, size = 0x1000, scoped, tag = 'output window, operand 0, single buffered']
    %6 = vsyncpa [#allocation3], 0
    %7 = vsyncpa [#allocation4], 0
    // Predicated region
    $region2: #{tpu_custom_call.1} parent=1 // pred_check
      _
    $region3: #{tpu_custom_call.1} parent=1 // pred_check_branch
      %9 = sbr.rel (0) target = $region5
    $region4: #{tpu_custom_call.1} parent=1 // pred_region
      %s11 = ssub.s32 128, 128
      %12 = vsyncadd [#allocation3], %s11
      %s14 = sshll.u32 [#allocation2], 4
      %s15 = int_to_ptr.vmem [resolvable:$true] %s14
      %17 = dma.hbm_to_vmem [thread:$0]  %s0, 128, %s15, [#allocation3]
    $region5: #{tpu_custom_call.1} parent=1 // pred_fallthru
      _
    // Predicated region
    $region6: #{tpu_custom_call.1} parent=1 // pred_check
      _
    $region7: #{tpu_custom_call.1} parent=1 // pred_check_branch
      %19 = sbr.rel (0) target = $region9
    $region8: #{tpu_custom_call.1} parent=1 // pred_region
      %20 = dma.done [#allocation3], 128
    $region9: #{tpu_custom_call.1} parent=1 // pred_fallthru
      _
    %v21 = vld [vmem:[#allocation2] sm:$0xff]
    %22 = vrot.lane.b32.xlu0 %v21, 1
    %v23 = vpop.permute.xlu0 %22
    %24 = vst [vmem:[#allocation5] sm:$0xff] %v23
    // Predicated region
    $region10: #{tpu_custom_call.1} parent=1 // pred_check
      _
    $region11: #{tpu_custom_call.1} parent=1 // pred_check_branch
      %26 = sbr.rel (0) target = $region13
    $region12: #{tpu_custom_call.1} parent=1 // pred_region
      %s28 = ssub.s32 128, 128
      %29 = vsyncadd [#allocation4], %s28
      %s31 = sshll.u32 [#allocation5], 4
      %s32 = int_to_ptr.vmem [resolvable:$true] %s31
      %34 = dma.vmem_to_hbm [thread:$0]  %s32, 128, %s1, [#allocation4]
    $region13: #{tpu_custom_call.1} parent=1 // pred_fallthru
      _
    // Predicated region
    $region14: #{tpu_custom_call.1} parent=1 // pred_check
      _
    $region15: #{tpu_custom_call.1} parent=1 // pred_check_branch
      %36 = sbr.rel (0) target = $region17
    $region16: #{tpu_custom_call.1} parent=1 // pred_region
      %37 = dma.done [#allocation4], 128
    $region17: #{tpu_custom_call.1} parent=1 // pred_fallthru
      _
    %38 = vsyncpa [#allocation3], 1
    %39 = vsyncpa [#allocation4], 1

</llo_original>
